<compile_context>
chip_gen: v7x
topology: tpu7x:2x2x1
jax: 0.10.0
libtpu: 0.0.40
codegen_flags: <defaults>
</compile_context>

<pallas_src>
import functools

import jax
import jax.numpy as jnp
from jax.experimental import pallas as pl
from jax.experimental.pallas import tpu as pltpu

LANES = 128
SUB_BF16 = 16  # bf16 packs 2 rows per sublane -> align second-minor dims to 16


def _round_up(a, m):
    return ((a + m - 1) // m) * m


def _cdiv(a, b):
    return -(-a // b)


def a2c_kernel(x_ref, p_ref, out_ref, *, obs_pad, actions):
    # x_ref   : (TB, obs_pad) bf16        = [obs | 1 (bias lane) | 0-pad]
    # p_ref   : (obs_pad + 128, 128) bf16 packed parameters:
    #             rows [0, obs_pad)          : W1 augmented (row `obs` = b1,
    #                                          plus a 1.0 at lane `hidden`
    #                                          creating a constant-1 hidden lane)
    #             rows [obs_pad, obs_pad+128): fused [actor | critic] head
    #                                          weights, row `hidden` = head biases
    # out_ref : (TB, 128) f32 lane-dense slab = [probs (A) | value (1) | 0-pad]
    x = x_ref[...]
    w1 = p_ref[0:obs_pad, :]                    # 16-row-aligned static view
    wh = p_ref[obs_pad:obs_pad + LANES, :]      # 16-row-aligned static view

    # linear1 (+ bias, folded in) and ReLU.  Dropout is identity (eval mode).
    # TODO(synk): training-mode dropout would need pltpu.prng_seed +
    #             pltpu.stateful_bernoulli; eval-mode semantics kept here.
    h = jnp.maximum(jnp.dot(x, w1, preferred_element_type=jnp.float32), 0.0)

    # Fused actor+critic head (+ biases): one bf16 MXU matmul, f32 accumulation.
    z = jnp.dot(h.astype(jnp.bfloat16), wh,
                preferred_element_type=jnp.float32)          # (TB, 128) f32

    lane = jax.lax.broadcasted_iota(jnp.int32, z.shape, 1)
    is_actor = lane < actions

    # Softmax over the actor lanes only (pad lanes masked to -inf -> exp == 0).
    logits = jnp.where(is_actor, z, -jnp.inf)
    m = jnp.max(logits, axis=1, keepdims=True)
    e = jnp.exp(logits - m)
    denom = jnp.sum(e, axis=1, keepdims=True)
    probs = e / denom      # exact division: probs feed log-pi / entropy downstream

    # Single unmasked lane-dense store: [probs | value | zeros].
    out_ref[...] = jnp.where(is_actor, probs,
                             jnp.where(lane == actions, z, 0.0))


def pack_a2c_params(w1, b1, wa, ba, wc, bc):
    """Pack all parameters into one lane-dense bf16 block.

    Call ONCE per optimizer update (not per rollout step); the returned block
    is what `a2c_evaluate_actions` consumes.
    """
    obs, hidden = w1.shape
    actions = wa.shape[1]
    assert hidden + 1 <= LANES and actions + 1 <= LANES

    obs_pad = _round_up(obs + 1, SUB_BF16)      # +1 bias lane, bf16 row align
    p_rows = obs_pad + LANES

    params = jnp.zeros((p_rows, LANES), jnp.float32)
    # W1 augmented block.
    params = params.at[:obs, :hidden].set(w1)
    params = params.at[obs, :hidden].set(b1)
    params = params.at[obs, hidden].set(1.0)    # constant-1 hidden lane
    # Fused head block: lanes [0:A) actor, lane A critic; biases in row `hidden`.
    params = params.at[obs_pad:obs_pad + hidden, :actions].set(wa)
    params = params.at[obs_pad:obs_pad + hidden, actions].set(wc[:, 0])
    params = params.at[obs_pad + hidden, :actions].set(ba)
    params = params.at[obs_pad + hidden, actions].set(bc[0])
    return params.astype(jnp.bfloat16)


@functools.partial(jax.jit, static_argnames=("actions",))
def a2c_evaluate_actions(x, packed_params, *, actions):
    """Whole A2C MLP in one Pallas call; returns (action_probs, state_values)."""
    B, obs = x.shape
    p_rows, _ = packed_params.shape
    obs_pad = p_rows - LANES

    # Batch tiling: large sublane-aligned tiles (fewer ~0.35us grid steps),
    # sized to avoid last-tile padding waste; keep >=2 steps for large batches
    # so the "parallel" axis shards across v7x's two TensorCores.
    CAP = 2048
    num_tiles = max(1, _cdiv(B, CAP))
    if B > 1024 and num_tiles < 2:
        num_tiles = 2
    tb = _round_up(_cdiv(B, num_tiles), SUB_BF16)
    b_pad = tb * num_tiles

    # x padding: single fused concat+pad; bf16 halves the input DMA bytes and
    # feeds the MXU its native dtype.
    x_aug = jnp.concatenate(
        [x.astype(jnp.bfloat16), jnp.ones((B, 1), jnp.bfloat16)], axis=1)
    x_pad = jnp.pad(x_aug, ((0, b_pad - B), (0, obs_pad - (obs + 1))))

    cost = pl.CostEstimate(
        flops=2 * b_pad * LANES * (obs_pad + LANES),
        transcendentals=b_pad * LANES,
        bytes_accessed=2 * (b_pad * obs_pad + p_rows * LANES) + 4 * b_pad * LANES,
    )

    out = pl.pallas_call(
        functools.partial(a2c_kernel, obs_pad=obs_pad, actions=actions),
        out_shape=jax.ShapeDtypeStruct((b_pad, LANES), jnp.float32),
        grid_spec=pltpu.PrefetchScalarGridSpec(
            num_scalar_prefetch=0,
            grid=(num_tiles,),
            in_specs=[
                pl.BlockSpec((tb, obs_pad), lambda i: (i, 0)),       # x tile
                # ~34 KB weights, resident (constant block index) across grid.
                pl.BlockSpec((p_rows, LANES), lambda i: (0, 0)),
            ],
            out_specs=pl.BlockSpec((tb, LANES), lambda i: (i, 0)),   # lane-dense slab
        ),
        compiler_params=pltpu.CompilerParams(
            dimension_semantics=("parallel",)),
        cost_estimate=cost,
    )(x_pad, packed_params)

    probs = out[:B, :actions]
    value = out[:B, actions:actions + 1]
    return probs, value


def init_params(key, obs_dim, hidden, action_space):
    """Deterministic PyTorch-Linear-style init: U(-1/sqrt(fan_in), 1/sqrt(fan_in))."""
    ks = jax.random.split(key, 6)

    def lin(kw, kb, fan_in, fan_out):
        bound = 1.0 / jnp.sqrt(jnp.float32(fan_in))
        # stored as (in, out) == transpose of torch's (out, in)
        w = jax.random.uniform(kw, (fan_in, fan_out), jnp.float32, -bound, bound)
        b = jax.random.uniform(kb, (fan_out,), jnp.float32, -bound, bound)
        return w, b

    w1, b1 = lin(ks[0], ks[1], obs_dim, hidden)       # linear1
    wa, ba = lin(ks[2], ks[3], hidden, action_space)  # actor
    wc, bc = lin(ks[4], ks[5], hidden, 1)             # critic
    return w1, b1, wa, ba, wc, bc


if __name__ == "__main__":
    # CartPole-like sizes: observation_space=(4,), action_space=2, hidden=[32]
    OBS, HIDDEN, ACTIONS = 4, 32, 2

    key = jax.random.PRNGKey(0)
    k_x1, k_x2, k_p = jax.random.split(key, 3)
    w1, b1, wa, ba, wc, bc = init_params(k_p, OBS, HIDDEN, ACTIONS)

    # Pack once (per weight update), reuse across rollout steps.
    packed = jax.block_until_ready(pack_a2c_params(w1, b1, wa, ba, wc, bc))

    def reference(x):
        h = jnp.maximum(x @ w1 + b1, 0.0)
        return jax.nn.softmax(h @ wa + ba, axis=1), h @ wc + bc

    # Small batch (primary check) + a larger batch that exercises the 2-tile grid.
    for B, k_x in ((8, k_x1), (3000, k_x2)):
        x = jax.random.normal(k_x, (B, OBS), dtype=jnp.float32)
        probs, value = a2c_evaluate_actions(x, packed, actions=ACTIONS)
        jax.block_until_ready((probs, value))

        probs_ref, value_ref = reference(x)
        assert probs.shape == (B, ACTIONS) and value.shape == (B, 1)
        # bf16 MXU inputs vs f32 reference -> tolerances cover bf16 rounding.
        assert jnp.allclose(probs, probs_ref, atol=3e-2), "actor mismatch"
        assert jnp.allclose(value, value_ref, atol=5e-2, rtol=5e-2), "critic mismatch"
        # Exact-division softmax: rows sum to 1 to f32 precision.
        assert jnp.allclose(jnp.sum(probs, axis=1), 1.0, atol=1e-5)

    print("KERNEL_OK")
</pallas_src>

<mosaic_0001>
module attributes {stable_mosaic.version = 11 : i64} {
  func.func @a2c_kernel(%arg0: i32, %arg1: memref<16x16xbf16, #tpu.memory_space<vmem>>, %arg2: memref<144x128xbf16, #tpu.memory_space<vmem>>, %arg3: memref<16x128xf32, #tpu.memory_space<vmem>>) attributes {dimension_semantics = [#tpu.dimension_semantics<parallel>], iteration_bounds = array<i64: 1>, scalar_prefetch = 0 : i64, scratch_operands = 0 : i64, tpu.core_type = #tpu.core_type<tc>, window_params = [{transform_indices = @transform_0, window_bounds = array<i64: 16, 16>}, {pipeline_mode = #tpu.pipeline_mode<synchronous>, transform_indices = @transform_1, window_bounds = array<i64: 144, 128>}, {transform_indices = @transform_2, window_bounds = array<i64: 16, 128>}]} {
    %c0 = arith.constant 0 : index
    %c0_0 = arith.constant 0 : index
    %0 = vector.load %arg1[%c0, %c0_0] : memref<16x16xbf16, #tpu.memory_space<vmem>>, vector<16x16xbf16>
    %c0_1 = arith.constant 0 : index
    %c0_2 = arith.constant 0 : index
    %1 = vector.load %arg2[%c0_1, %c0_2] : memref<144x128xbf16, #tpu.memory_space<vmem>>, vector<16x128xbf16>
    %c16 = arith.constant 16 : index
    %c0_3 = arith.constant 0 : index
    %2 = vector.load %arg2[%c16, %c0_3] : memref<144x128xbf16, #tpu.memory_space<vmem>>, vector<128x128xbf16>
    %cst = arith.constant dense<0.000000e+00> : vector<16x128xf32>
    %3 = tpu.matmul %0, %1, %cst {dimension_numbers = #tpu.dot_dimension_numbers<[1], [0], [0], [1], [0, 0, 1, 1], [], []>} : vector<16x16xbf16>, vector<16x128xbf16>, vector<16x128xf32> -> vector<16x128xf32>
    %cst_4 = arith.constant 0.000000e+00 : f32
    %4 = vector.broadcast %cst_4 : f32 to vector<16x128xf32>
    %5 = arith.maximumf %3, %4 : vector<16x128xf32>
    %6 = arith.truncf %5 : vector<16x128xf32> to vector<16x128xbf16>
    %cst_5 = arith.constant dense<0.000000e+00> : vector<16x128xf32>
    %7 = tpu.matmul %6, %2, %cst_5 {dimension_numbers = #tpu.dot_dimension_numbers<[1], [0], [0], [1], [0, 0, 1, 1], [], []>} : vector<16x128xbf16>, vector<128x128xbf16>, vector<16x128xf32> -> vector<16x128xf32>
    %8 = tpu.iota {dimensions = array<i32: 1>} : vector<16x128xi32>
    %c2_i32 = arith.constant 2 : i32
    %9 = vector.broadcast %c2_i32 : i32 to vector<16x128xi32>
    %10 = arith.cmpi slt, %8, %9 : vector<16x128xi32>
    %cst_6 = arith.constant 0xFF800000 : f32
    %11 = vector.broadcast %cst_6 : f32 to vector<16x128xf32>
    %12 = arith.select %10, %7, %11 : vector<16x128xi1>, vector<16x128xf32>
    %cst_7 = arith.constant dense<0xFF800000> : vector<16xf32>
    %13 = vector.multi_reduction <maximumf>, %12, %cst_7 [1] : vector<16x128xf32> to vector<16xf32>
    %14 = vector.shape_cast %13 : vector<16xf32> to vector<16x1xf32>
    %15 = vector.broadcast %14 : vector<16x1xf32> to vector<16x128xf32>
    %16 = arith.subf %12, %15 : vector<16x128xf32>
    %17 = math.exp %16 : vector<16x128xf32>
    %cst_8 = arith.constant dense<0.000000e+00> : vector<16xf32>
    %18 = vector.multi_reduction <add>, %17, %cst_8 [1] : vector<16x128xf32> to vector<16xf32>
    %19 = vector.shape_cast %18 : vector<16xf32> to vector<16x1xf32>
    %20 = vector.broadcast %19 : vector<16x1xf32> to vector<16x128xf32>
    %21 = arith.divf %17, %20 : vector<16x128xf32>
    %c2_i32_9 = arith.constant 2 : i32
    %22 = vector.broadcast %c2_i32_9 : i32 to vector<16x128xi32>
    %23 = arith.cmpi eq, %8, %22 : vector<16x128xi32>
    %cst_10 = arith.constant 0.000000e+00 : f32
    %24 = vector.broadcast %cst_10 : f32 to vector<16x128xf32>
    %25 = arith.select %23, %7, %24 : vector<16x128xi1>, vector<16x128xf32>
    %26 = arith.select %10, %21, %25 : vector<16x128xi1>, vector<16x128xf32>
    %c0_11 = arith.constant 0 : index
    %c0_12 = arith.constant 0 : index
    %27 = vector.load %arg3[%c0_11, %c0_12] : memref<16x128xf32, #tpu.memory_space<vmem>>, vector<16x128xf32>
    tpu.vector_store %arg3[%c0_11, %c0_12], %26 {strides = array<i32>} : memref<16x128xf32, #tpu.memory_space<vmem>>, vector<16x128xf32>,
    return
  }
  func.func @transform_0(%arg0: i32) -> (i32, i32) {
    %c0_i32 = arith.constant 0 : i32
    %c0_i32_0 = arith.constant 0 : i32
    return %arg0, %c0_i32 : i32, i32
  }
  func.func @transform_1(%arg0: i32) -> (i32, i32) {
    %c0_i32 = arith.constant 0 : i32
    %c0_i32_0 = arith.constant 0 : i32
    %c0_i32_1 = arith.constant 0 : i32
    return %c0_i32, %c0_i32_0 : i32, i32
  }
  func.func @transform_2(%arg0: i32) -> (i32, i32) {
    %c0_i32 = arith.constant 0 : i32
    %c0_i32_0 = arith.constant 0 : i32
    return %arg0, %c0_i32 : i32, i32
  }
}

</mosaic_0001>

<llo_original>
// kernel: a2c_evaluate_actions.1
$region0: #{a2c_evaluate_actions.1}
  #allocation0 [shape = 'u32[]', space=smem, size = 0x4, offset = 0x4, fixed_abs, tag = 'smem constant byte address 0x4 - core index']
  #allocation1 [shape = 'u32[144,128]{1,0:T(1,128)}', space=vmem, size = 0x12000, scoped, tag = 'internal scratch']
  %s0 = inlined_call_operand.vmem [shape: bf16[16,16], index: 0, kind: input, shape index: {}]
  %s1 = inlined_call_operand.hbm [shape: bf16[144,128], index: 1, kind: input, shape index: {}]
  %s2 = inlined_call_operand.vmem [shape: f32[16,128], index: 2, kind: output, shape index: {}]
  %s3 = sld [smem:[#allocation0]]
  $region22: #{a2c_evaluate_actions.1} parent=0
    _
  %s5 = ssub.s32 1, %s3
  %s6 = scalar_select 0, %s5, %s3
  $region1: #{a2c_evaluate_actions.1} parent=0
    #allocation2 [shape = 'u8[36864]{0}', space=vmem, size = 0x9000, scoped, tag = 'input window, operand 1, single buffered']
    #allocation3 [shape = 's32[1]{0}', space=sflag, size = 0x4, scoped, tag = 'scoped memory for a2c_evaluate_actions.1']
    %7 = vsyncpa [#allocation3], 0
    // Predicated region
    $region2: #{a2c_evaluate_actions.1} parent=1 // pred_check
      _
    $region3: #{a2c_evaluate_actions.1} parent=1 // pred_check_branch
      %9 = sbr.rel (0) target = $region5
    $region4: #{a2c_evaluate_actions.1} parent=1 // pred_region
      _
    $region5: #{a2c_evaluate_actions.1} parent=1 // pred_fallthru
      _
    // Predicated region
    $region6: #{a2c_evaluate_actions.1} parent=1 // pred_check
      _
    $region7: #{a2c_evaluate_actions.1} parent=1 // pred_check_branch
      %11 = sbr.rel (0) target = $region9
    $region8: #{a2c_evaluate_actions.1} parent=1 // pred_region
      %s13 = ssub.s32 1152, 1152
      %14 = vsyncadd [#allocation3], %s13
      %s15 = sshll.u32 [#allocation2], 4
      %s16 = int_to_ptr.vmem [resolvable:$true] %s15
      %21 = dma.hbm_to_vmem [thread:$0]  %s1, 1152, %s16, [#allocation3], 64, 64, 4
    $region9: #{a2c_evaluate_actions.1} parent=1 // pred_fallthru
      _
    // Predicated region
    $region10: #{a2c_evaluate_actions.1} parent=1 // pred_check
      _
    $region11: #{a2c_evaluate_actions.1} parent=1 // pred_check_branch
      %23 = sbr.rel (0) target = $region13
    $region12: #{a2c_evaluate_actions.1} parent=1 // pred_region
      %24 = dma.done [#allocation3], 1152
    $region13: #{a2c_evaluate_actions.1} parent=1 // pred_fallthru
      _
    %v26 = vld [vmem:[%s0] sm:$0xf]
    %v27 = vld [vmem:[%s0 + $0x4] sm:$0xf]
    %v28 = vld [vmem:[#allocation2] sm:$0xf]
    %v29 = vld [vmem:[#allocation2 + $0x4] sm:$0xf]
    %v30 = vld [vmem:[#allocation2 + $0x8] sm:$0xf]
    %v31 = vld [vmem:[#allocation2 + $0xc] sm:$0xf]
    %v32 = vld [vmem:[#allocation2 + $0x10] sm:$0xf]
    %v33 = vld [vmem:[#allocation2 + $0x14] sm:$0xf]
    %v34 = vld [vmem:[#allocation2 + $0x18] sm:$0xf]
    %v35 = vld [vmem:[#allocation2 + $0x1c] sm:$0xf]
    %v36 = vld [vmem:[#allocation2 + $0x20] sm:$0xf]
    %v37 = vld [vmem:[#allocation2 + $0x24] sm:$0xf]
    %v38 = vld [vmem:[#allocation2 + $0x28] sm:$0xf]
    %v39 = vld [vmem:[#allocation2 + $0x2c] sm:$0xf]
    %v40 = vld [vmem:[#allocation2 + $0x30] sm:$0xf]
    %v41 = vld [vmem:[#allocation2 + $0x34] sm:$0xf]
    %v42 = vld [vmem:[#allocation2 + $0x38] sm:$0xf]
    %v43 = vld [vmem:[#allocation2 + $0x3c] sm:$0xf]
    %v44 = vld [vmem:[#allocation2 + $0x40] sm:$0xf]
    %v45 = vld [vmem:[#allocation2 + $0x44] sm:$0xf]
    %v48 = vunpack.c.l.b16 %v26
    %v49 = vunpack.c.l.b16 %v27
    %v50 = vpack.c.b16 %v49, %v48
    %v53 = vunpack.c.l.b16 %v28
    %v54 = vunpack.c.l.b16 %v29
    %v55 = vpack.c.b16 %v54, %v53
    %vm57 = vcmask 130048
    %v59 = vsel %vm57, %v50, 0
    %61 = vmatprep.subr.bf16.mxu0 0
    %62 = vmatpush1.bf16.msra.mxu0 %v55
    %63 = vmatprep.subr.bf16.mxu0 0
    %64 = vmatpush1.bf16.msra.mxu0 0
    %65 = vmatprep.subr.bf16.mxu0 0
    %66 = vmatpush1.bf16.msra.mxu0 0
    %67 = vmatprep.subr.bf16.mxu0 0
    %68 = vmatpush1.bf16.msra.mxu0 0
    %69 = vmatprep.subr.bf16.mxu0 0
    %70 = vmatpush1.bf16.msra.mxu0 0
    %71 = vmatprep.subr.bf16.mxu0 0
    %72 = vmatpush1.bf16.msra.mxu0 0
    %73 = vmatprep.subr.bf16.mxu0 0
    %74 = vmatpush1.bf16.msra.mxu0 0
    %75 = vmatprep.subr.bf16.mxu0 0
    %76 = vmatpush1.bf16.msra.mxu0 0
    %77 = vmatprep.subr.bf16.mxu0 0
    %78 = vmatpush1.bf16.msra.mxu0 0
    %79 = vmatprep.subr.bf16.mxu0 0
    %80 = vmatpush1.bf16.msra.mxu0 0
    %81 = vmatprep.subr.bf16.mxu0 0
    %82 = vmatpush1.bf16.msra.mxu0 0
    %83 = vmatprep.subr.bf16.mxu0 0
    %84 = vmatpush1.bf16.msra.mxu0 0
    %85 = vmatprep.subr.bf16.mxu0 0
    %86 = vmatpush1.bf16.msra.mxu0 0
    %87 = vmatprep.subr.bf16.mxu0 0
    %88 = vmatpush1.bf16.msra.mxu0 0
    %89 = vmatprep.subr.bf16.mxu0 0
    %90 = vmatpush1.bf16.msra.mxu0 0
    %91 = vmatprep.subr.bf16.mxu0 0
    %92 = vmatpush1.bf16.msra.mxu0 0
    %93 = vmatprep.mubr.bf16.mxu0 0
    %94 = vmatmul.mubr.bf16.gmra.mrb[0].mxu0 %v59
    %v95 = vpop.f32.mrb[0].mxu0
    %v96 = vadd.f32 0.0, %v95
    %v97 = vpop.f32.mrb[0].mxu0
    %v98 = vpop.f32.mrb[0].mxu0
    %v99 = vadd.f32 0.0, %v98
    %v100 = vpop.f32.mrb[0].mxu0
    %101 = vdwg.mxu0
    %v102 = vmax.f32 %v96, 0.0
    %v103 = vmax.f32 %v99, 0.0
    %v104 = vpack.c.bf16 %v103, %v102
    %v121 = vunpack.c.l.b16 %v30
    %v122 = vunpack.c.l.b16 %v31
    %v123 = vunpack.c.l.b16 %v32
    %v124 = vunpack.c.l.b16 %v33
    %v125 = vunpack.c.l.b16 %v34
    %v126 = vunpack.c.l.b16 %v35
    %v127 = vunpack.c.l.b16 %v36
    %v128 = vunpack.c.l.b16 %v37
    %v129 = vunpack.c.l.b16 %v38
    %v130 = vunpack.c.l.b16 %v39
    %v131 = vunpack.c.l.b16 %v40
    %v132 = vunpack.c.l.b16 %v41
    %v133 = vunpack.c.l.b16 %v42
    %v134 = vunpack.c.l.b16 %v43
    %v135 = vunpack.c.l.b16 %v44
    %v136 = vunpack.c.l.b16 %v45
    %v137 = vpack.c.b16 %v122, %v121
    %v138 = vpack.c.b16 %v124, %v123
    %v139 = vpack.c.b16 %v126, %v125
    %v140 = vpack.c.b16 %v128, %v127
    %v141 = vpack.c.b16 %v130, %v129
    %v142 = vpack.c.b16 %v132, %v131
    %v143 = vpack.c.b16 %v134, %v133
    %v144 = vpack.c.b16 %v136, %v135
    %153 = vmatprep.subr.bf16.mxu0 0
    %154 = vmatpush1.bf16.msra.mxu0 %v137
    %155 = vmatprep.subr.bf16.mxu0 0
    %156 = vmatpush1.bf16.msra.mxu0 %v138
    %157 = vmatprep.subr.bf16.mxu0 0
    %158 = vmatpush1.bf16.msra.mxu0 %v139
    %159 = vmatprep.subr.bf16.mxu0 0
    %160 = vmatpush1.bf16.msra.mxu0 %v140
    %161 = vmatprep.subr.bf16.mxu0 0
    %162 = vmatpush1.bf16.msra.mxu0 %v141
    %163 = vmatprep.subr.bf16.mxu0 0
    %164 = vmatpush1.bf16.msra.mxu0 %v142
    %165 = vmatprep.subr.bf16.mxu0 0
    %166 = vmatpush1.bf16.msra.mxu0 %v143
    %167 = vmatprep.subr.bf16.mxu0 0
    %168 = vmatpush1.bf16.msra.mxu0 %v144
    %169 = vmatprep.subr.bf16.mxu0 0
    %170 = vmatpush1.bf16.msra.mxu0 0
    %171 = vmatprep.subr.bf16.mxu0 0
    %172 = vmatpush1.bf16.msra.mxu0 0
    %173 = vmatprep.subr.bf16.mxu0 0
    %174 = vmatpush1.bf16.msra.mxu0 0
    %175 = vmatprep.subr.bf16.mxu0 0
    %176 = vmatpush1.bf16.msra.mxu0 0
    %177 = vmatprep.subr.bf16.mxu0 0
    %178 = vmatpush1.bf16.msra.mxu0 0
    %179 = vmatprep.subr.bf16.mxu0 0
    %180 = vmatpush1.bf16.msra.mxu0 0
    %181 = vmatprep.subr.bf16.mxu0 0
    %182 = vmatpush1.bf16.msra.mxu0 0
    %183 = vmatprep.subr.bf16.mxu0 0
    %184 = vmatpush1.bf16.msra.mxu0 0
    %185 = vmatprep.mubr.bf16.mxu0 0
    %186 = vmatmul.mubr.bf16.gmra.mrb[0].mxu0 %v104
    %v187 = vpop.f32.mrb[0].mxu0
    %v188 = vadd.f32 0.0, %v187
    %v189 = vpop.f32.mrb[0].mxu0
    %v190 = vpop.f32.mrb[0].mxu0
    %v191 = vadd.f32 0.0, %v190
    %v192 = vpop.f32.mrb[0].mxu0
    %193 = vdwg.mxu0
    %v194 = vlaneseq
    %v195 = vand.u32 %v194, 127
    %vm196 = vcmp.lt.s32.totalorder %v195, 2
    %v197 = vsel %vm196, %v188, -inf
    %v198 = vsel %vm196, %v191, -inf
    %199 = vmax.xlane.f32.xlu0 %v197
    %v200 = vpop.xlane.xlu0 %199
    %201 = vmax.xlane.f32.xlu0 %v198
    %v202 = vpop.xlane.xlu0 %201
    %v203 = vsub.f32 %v197, %v200
    %v204 = vsub.f32 %v198, %v202
    %v205 = vmul.f32 %v203, 1.442695
    %v206 = vpow.pop %v205
    %v207 = vmul.f32 %v204, 1.442695
    %v208 = vpow.pop %v207
    %209 = vadd.xlane.f32.xlu0 %v206
    %v210 = vpop.xlane.xlu0 %209
    %211 = vadd.xlane.f32.xlu0 %v208
    %v212 = vpop.xlane.xlu0 %211
    %v213 = vrcp.pop %v210
    %v214 = vmul.f32 %v206, %v213
    %v215 = vrcp.pop %v212
    %v216 = vmul.f32 %v208, %v215
    %vm217 = vcmp.eq.s32.totalorder %v195, 2
    %v218 = vsel %vm217, %v188, 0.0
    %v219 = vsel %vm217, %v191, 0.0
    %v220 = vsel %vm196, %v214, %v218
    %v221 = vsel %vm196, %v216, %v219
    %222 = vst [vmem:[%s2] sm:$0xff] %v220
    %223 = vst [vmem:[%s2 + $0x8] sm:$0xff] %v221
    // Predicated region
    $region14: #{a2c_evaluate_actions.1} parent=1 // pred_check
      _
    $region15: #{a2c_evaluate_actions.1} parent=1 // pred_check_branch
      %225 = sbr.rel (0) target = $region17
    $region16: #{a2c_evaluate_actions.1} parent=1 // pred_region
      _
    $region17: #{a2c_evaluate_actions.1} parent=1 // pred_fallthru
      _
    // Predicated region
    $region18: #{a2c_evaluate_actions.1} parent=1 // pred_check
      _
    $region19: #{a2c_evaluate_actions.1} parent=1 // pred_check_branch
      %227 = sbr.rel (0) target = $region21
    $region20: #{a2c_evaluate_actions.1} parent=1 // pred_region
      _
    $region21: #{a2c_evaluate_actions.1} parent=1 // pred_fallthru
      _
    %228 = vsyncpa [#allocation3], 1

</llo_original>
